<compile_context>
chip_gen: v5e
topology: v5e:2x2
jax: 0.10.0
libtpu: 0.0.40
codegen_flags: <defaults>
</compile_context>

<pallas_src>
import jax
import jax.numpy as jnp
from jax.experimental import pallas as pl
from jax.experimental.pallas import tpu as pltpu

LANE = 128          # TPU lane width: output slab last-dim granularity
NEG_BIG = -1.0e30   # bias padding value for invalid class lanes


def _round_up(x, m):
    return ((x + m - 1) // m) * m


def _mlp_logsoftmax_kernel(x_ref, w1_ref, b1_ref, w2_ref, b2_ref,
                           w3_ref, b3_ref, o_ref):
    # fc1 + ReLU  (bf16 MXU inputs, f32 accumulate / elementwise)
    h1 = jnp.dot(x_ref[...], w1_ref[...], preferred_element_type=jnp.float32)
    h1 = jnp.maximum(h1 + b1_ref[...], 0.0)

    # fc2 + ReLU
    h2 = jnp.dot(h1.astype(jnp.bfloat16), w2_ref[...],
                 preferred_element_type=jnp.float32)
    h2 = jnp.maximum(h2 + b2_ref[...], 0.0)

    # fc3 (class axis padded to 128 lanes; padded cols have zero weights and
    # bias = NEG_BIG, so they never affect the max or the exp-sum below).
    logits = jnp.dot(h2.astype(jnp.bfloat16), w3_ref[...],
                     preferred_element_type=jnp.float32)
    logits = logits + b3_ref[...]

    # log_softmax along the class axis (padded lanes self-mask via NEG_BIG).
    m = jnp.max(logits, axis=1, keepdims=True)
    shifted = logits - m
    sum_exp = jnp.sum(jnp.exp(shifted), axis=1, keepdims=True)
    # Lane-dense store of the full 128-wide slab; padded columns are sliced
    # off by the wrapper.
    o_ref[...] = shifted - jnp.log(sum_exp)


def _pick_tile_b(B, ft_in, c_pad, vmem_budget_bytes=8 * 1024 * 1024):
    """Largest batch tile (multiple of 8, <=1024) whose streamed buffers
    (double-buffered bf16 x tile + f32 output tile) fit the VMEM budget."""
    per_row = (ft_in * 2 + c_pad * 4) * 2  # bytes, double buffered
    t = max(8, (vmem_budget_bytes // per_row) // 8 * 8)
    t = min(t, 1024)
    t = min(t, _round_up(B, 8))
    return t


def linear_classifier_forward(x, params):
    """x: (B, ft_in) float32. Returns (B, nb_classes) float32 log-probabilities."""
    w1, b1, w2, b2, w3, b3 = params
    B, ft_in = x.shape
    nb_classes = w3.shape[1]

    # Lane-dense output: pad class axis to a multiple of 128.
    c_pad = _round_up(max(nb_classes, LANE), LANE)
    w3p = jnp.pad(w3, ((0, 0), (0, c_pad - nb_classes)))
    b3p = jnp.pad(b3, ((0, 0), (0, c_pad - nb_classes)),
                  constant_values=NEG_BIG)

    # bf16 MXU inputs; biases stay f32 (added to the f32 accumulator).
    xb = x.astype(jnp.bfloat16)
    w1b = w1.astype(jnp.bfloat16)
    w2b = w2.astype(jnp.bfloat16)
    w3b = w3p.astype(jnp.bfloat16)

    # Batch tiling: TILE_B rows per grid step (multiple of 8), pad B if needed.
    tile_b = _pick_tile_b(B, ft_in, c_pad)
    b_pad = _round_up(B, tile_b)
    if b_pad != B:
        xb = jnp.pad(xb, ((0, b_pad - B), (0, 0)))
    grid = (b_pad // tile_b,)

    out = pl.pallas_call(
        _mlp_logsoftmax_kernel,
        out_shape=jax.ShapeDtypeStruct((b_pad, c_pad), jnp.float32),
        grid=grid,
        in_specs=[
            pl.BlockSpec((tile_b, ft_in), lambda i: (i, 0)),   # x: streamed per tile
            pl.BlockSpec(w1b.shape, lambda i: (0, 0)),          # weights/biases: resident
            pl.BlockSpec(b1.shape, lambda i: (0, 0)),
            pl.BlockSpec(w2b.shape, lambda i: (0, 0)),
            pl.BlockSpec(b2.shape, lambda i: (0, 0)),
            pl.BlockSpec(w3b.shape, lambda i: (0, 0)),
            pl.BlockSpec(b3p.shape, lambda i: (0, 0)),
        ],
        out_specs=pl.BlockSpec((tile_b, c_pad), lambda i: (i, 0)),
        compiler_params=pltpu.CompilerParams(
            dimension_semantics=("parallel",)),
    )(xb, w1b, b1, w2b, b2, w3b, b3p)

    return out[:B, :nb_classes]


def init_params(key, ft_in, nb_classes):
    """Deterministic init mimicking PyTorch nn.Linear (uniform +/- 1/sqrt(fan_in)).
    Weights stored transposed relative to PyTorch: (in_features, out_features)."""
    dims = [(ft_in, 32), (32, 16), (16, nb_classes)]
    params = []
    for (fan_in, fan_out) in dims:
        key, kw, kb = jax.random.split(key, 3)
        bound = 1.0 / jnp.sqrt(jnp.float32(fan_in))
        w = jax.random.uniform(kw, (fan_in, fan_out), jnp.float32, -bound, bound)
        b = jax.random.uniform(kb, (1, fan_out), jnp.float32, -bound, bound)
        params += [w, b]
    return tuple(params)


def _reference_forward(x, params):
    w1, b1, w2, b2, w3, b3 = params
    h1 = jnp.maximum(x @ w1 + b1, 0.0)
    h2 = jnp.maximum(h1 @ w2 + b2, 0.0)
    logits = h2 @ w3 + b3
    return jax.nn.log_softmax(logits, axis=1)


if __name__ == "__main__":
    key = jax.random.PRNGKey(0)
    B, ft_in, nb_classes = 8, 64, 10

    key, kx = jax.random.split(key)
    x = jax.random.normal(kx, (B, ft_in), jnp.float32)
    params = init_params(key, ft_in, nb_classes)

    out = linear_classifier_forward(x, params)
    out = jax.block_until_ready(out)

    # sanity: log_softmax rows should exponentiate-and-sum to ~1
    row_sums = jnp.sum(jnp.exp(out), axis=1)
    assert out.shape == (B, nb_classes)
    assert bool(jnp.all(jnp.abs(row_sums - 1.0) < 1e-3))

    # sanity: matches a pure-JAX f32 reference (loose tolerance: bf16 MXU inputs)
    ref = _reference_forward(x, params)
    assert bool(jnp.all(jnp.abs(out - ref) < 5e-2))

    print("KERNEL_OK")
</pallas_src>

<mosaic_0001>
module attributes {stable_mosaic.version = 11 : i64} {
  func.func @_mlp_logsoftmax_kernel(%arg0: i32, %arg1: memref<8x64xbf16, #tpu.memory_space<vmem>>, %arg2: memref<64x32xbf16, #tpu.memory_space<vmem>>, %arg3: memref<1x32xf32, #tpu.memory_space<vmem>>, %arg4: memref<32x16xbf16, #tpu.memory_space<vmem>>, %arg5: memref<1x16xf32, #tpu.memory_space<vmem>>, %arg6: memref<16x128xbf16, #tpu.memory_space<vmem>>, %arg7: memref<1x128xf32, #tpu.memory_space<vmem>>, %arg8: memref<8x128xf32, #tpu.memory_space<vmem>>) attributes {dimension_semantics = [#tpu.dimension_semantics<parallel>], iteration_bounds = array<i64: 1>, scalar_prefetch = 0 : i64, scratch_operands = 0 : i64, tpu.core_type = #tpu.core_type<tc>, window_params = [{transform_indices = @transform_0, window_bounds = array<i64: 8, 64>}, {pipeline_mode = #tpu.pipeline_mode<synchronous>, transform_indices = @transform_1, window_bounds = array<i64: 64, 32>}, {pipeline_mode = #tpu.pipeline_mode<synchronous>, transform_indices = @transform_2, window_bounds = array<i64: 1, 32>}, {pipeline_mode = #tpu.pipeline_mode<synchronous>, transform_indices = @transform_3, window_bounds = array<i64: 32, 16>}, {pipeline_mode = #tpu.pipeline_mode<synchronous>, transform_indices = @transform_4, window_bounds = array<i64: 1, 16>}, {pipeline_mode = #tpu.pipeline_mode<synchronous>, transform_indices = @transform_5, window_bounds = array<i64: 16, 128>}, {pipeline_mode = #tpu.pipeline_mode<synchronous>, transform_indices = @transform_6, window_bounds = array<i64: 1, 128>}, {transform_indices = @transform_7, window_bounds = array<i64: 8, 128>}]} {
    %c0 = arith.constant 0 : index
    %c0_0 = arith.constant 0 : index
    %0 = vector.load %arg1[%c0, %c0_0] : memref<8x64xbf16, #tpu.memory_space<vmem>>, vector<8x64xbf16>
    %c0_1 = arith.constant 0 : index
    %c0_2 = arith.constant 0 : index
    %1 = vector.load %arg2[%c0_1, %c0_2] : memref<64x32xbf16, #tpu.memory_space<vmem>>, vector<64x32xbf16>
    %cst = arith.constant dense<0.000000e+00> : vector<8x32xf32>
    %2 = tpu.matmul %0, %1, %cst {dimension_numbers = #tpu.dot_dimension_numbers<[1], [0], [0], [1], [0, 0, 1, 1], [], []>} : vector<8x64xbf16>, vector<64x32xbf16>, vector<8x32xf32> -> vector<8x32xf32>
    %c0_3 = arith.constant 0 : index
    %c0_4 = arith.constant 0 : index
    %3 = vector.load %arg3[%c0_3, %c0_4] : memref<1x32xf32, #tpu.memory_space<vmem>>, vector<1x32xf32>
    %4 = vector.broadcast %3 : vector<1x32xf32> to vector<8x32xf32>
    %5 = arith.addf %2, %4 : vector<8x32xf32>
    %cst_5 = arith.constant 0.000000e+00 : f32
    %6 = vector.broadcast %cst_5 : f32 to vector<8x32xf32>
    %7 = arith.maximumf %5, %6 : vector<8x32xf32>
    %8 = arith.truncf %7 : vector<8x32xf32> to vector<8x32xbf16>
    %c0_6 = arith.constant 0 : index
    %c0_7 = arith.constant 0 : index
    %9 = vector.load %arg4[%c0_6, %c0_7] : memref<32x16xbf16, #tpu.memory_space<vmem>>, vector<32x16xbf16>
    %cst_8 = arith.constant dense<0.000000e+00> : vector<8x16xf32>
    %10 = tpu.matmul %8, %9, %cst_8 {dimension_numbers = #tpu.dot_dimension_numbers<[1], [0], [0], [1], [0, 0, 1, 1], [], []>} : vector<8x32xbf16>, vector<32x16xbf16>, vector<8x16xf32> -> vector<8x16xf32>
    %c0_9 = arith.constant 0 : index
    %c0_10 = arith.constant 0 : index
    %11 = vector.load %arg5[%c0_9, %c0_10] : memref<1x16xf32, #tpu.memory_space<vmem>>, vector<1x16xf32>
    %12 = vector.broadcast %11 : vector<1x16xf32> to vector<8x16xf32>
    %13 = arith.addf %10, %12 : vector<8x16xf32>
    %cst_11 = arith.constant 0.000000e+00 : f32
    %14 = vector.broadcast %cst_11 : f32 to vector<8x16xf32>
    %15 = arith.maximumf %13, %14 : vector<8x16xf32>
    %16 = arith.truncf %15 : vector<8x16xf32> to vector<8x16xbf16>
    %c0_12 = arith.constant 0 : index
    %c0_13 = arith.constant 0 : index
    %17 = vector.load %arg6[%c0_12, %c0_13] : memref<16x128xbf16, #tpu.memory_space<vmem>>, vector<16x128xbf16>
    %cst_14 = arith.constant dense<0.000000e+00> : vector<8x128xf32>
    %18 = tpu.matmul %16, %17, %cst_14 {dimension_numbers = #tpu.dot_dimension_numbers<[1], [0], [0], [1], [0, 0, 1, 1], [], []>} : vector<8x16xbf16>, vector<16x128xbf16>, vector<8x128xf32> -> vector<8x128xf32>
    %c0_15 = arith.constant 0 : index
    %c0_16 = arith.constant 0 : index
    %19 = vector.load %arg7[%c0_15, %c0_16] : memref<1x128xf32, #tpu.memory_space<vmem>>, vector<1x128xf32>
    %20 = vector.broadcast %19 : vector<1x128xf32> to vector<8x128xf32>
    %21 = arith.addf %18, %20 : vector<8x128xf32>
    %cst_17 = arith.constant dense<0xFF800000> : vector<8xf32>
    %22 = vector.multi_reduction <maximumf>, %21, %cst_17 [1] : vector<8x128xf32> to vector<8xf32>
    %23 = vector.shape_cast %22 : vector<8xf32> to vector<8x1xf32>
    %24 = vector.broadcast %23 : vector<8x1xf32> to vector<8x128xf32>
    %25 = arith.subf %21, %24 : vector<8x128xf32>
    %26 = math.exp %25 : vector<8x128xf32>
    %cst_18 = arith.constant dense<0.000000e+00> : vector<8xf32>
    %27 = vector.multi_reduction <add>, %26, %cst_18 [1] : vector<8x128xf32> to vector<8xf32>
    %28 = vector.shape_cast %27 : vector<8xf32> to vector<8x1xf32>
    %29 = math.log %28 : vector<8x1xf32>
    %30 = vector.broadcast %29 : vector<8x1xf32> to vector<8x128xf32>
    %31 = arith.subf %25, %30 : vector<8x128xf32>
    %c0_19 = arith.constant 0 : index
    %c0_20 = arith.constant 0 : index
    %32 = vector.load %arg8[%c0_19, %c0_20] : memref<8x128xf32, #tpu.memory_space<vmem>>, vector<8x128xf32>
    tpu.vector_store %arg8[%c0_19, %c0_20], %31 {strides = array<i32>} : memref<8x128xf32, #tpu.memory_space<vmem>>, vector<8x128xf32>,
    return
  }
  func.func @transform_0(%arg0: i32) -> (i32, i32) {
    %c0_i32 = arith.constant 0 : i32
    %c0_i32_0 = arith.constant 0 : i32
    return %arg0, %c0_i32 : i32, i32
  }
  func.func @transform_1(%arg0: i32) -> (i32, i32) {
    %c0_i32 = arith.constant 0 : i32
    %c0_i32_0 = arith.constant 0 : i32
    %c0_i32_1 = arith.constant 0 : i32
    return %c0_i32, %c0_i32_0 : i32, i32
  }
  func.func @transform_2(%arg0: i32) -> (i32, i32) {
    %c0_i32 = arith.constant 0 : i32
    %c0_i32_0 = arith.constant 0 : i32
    %c0_i32_1 = arith.constant 0 : i32
    return %c0_i32, %c0_i32_0 : i32, i32
  }
  func.func @transform_3(%arg0: i32) -> (i32, i32) {
    %c0_i32 = arith.constant 0 : i32
    %c0_i32_0 = arith.constant 0 : i32
    %c0_i32_1 = arith.constant 0 : i32
    return %c0_i32, %c0_i32_0 : i32, i32
  }
  func.func @transform_4(%arg0: i32) -> (i32, i32) {
    %c0_i32 = arith.constant 0 : i32
    %c0_i32_0 = arith.constant 0 : i32
    %c0_i32_1 = arith.constant 0 : i32
    return %c0_i32, %c0_i32_0 : i32, i32
  }
  func.func @transform_5(%arg0: i32) -> (i32, i32) {
    %c0_i32 = arith.constant 0 : i32
    %c0_i32_0 = arith.constant 0 : i32
    %c0_i32_1 = arith.constant 0 : i32
    return %c0_i32, %c0_i32_0 : i32, i32
  }
  func.func @transform_6(%arg0: i32) -> (i32, i32) {
    %c0_i32 = arith.constant 0 : i32
    %c0_i32_0 = arith.constant 0 : i32
    %c0_i32_1 = arith.constant 0 : i32
    return %c0_i32, %c0_i32_0 : i32, i32
  }
  func.func @transform_7(%arg0: i32) -> (i32, i32) {
    %c0_i32 = arith.constant 0 : i32
    %c0_i32_0 = arith.constant 0 : i32
    return %arg0, %c0_i32 : i32, i32
  }
}

</mosaic_0001>

<llo_original>
// kernel: tpu_custom_call.1
$region0: #{tpu_custom_call.1}
  #allocation0 [shape = 'u32[]', space=smem, size = 0x4, offset = 0x4, fixed_abs, tag = 'smem constant byte address 0x4 - core index']
  #allocation1 [shape = 'u32[72,128]{1,0:T(1,128)}', space=vmem, size = 0x9000, scoped, tag = 'internal scratch']
  %s0 = inlined_call_operand.vmem [shape: bf16[8,64], index: 0, kind: input, shape index: {}]
  %s1 = inlined_call_operand.vmem [shape: bf16[64,32], index: 1, kind: input, shape index: {}]
  %s2 = inlined_call_operand.vmem [shape: f32[1,32], index: 2, kind: input, shape index: {}]
  %s3 = inlined_call_operand.vmem [shape: bf16[32,16], index: 3, kind: input, shape index: {}]
  %s4 = inlined_call_operand.vmem [shape: f32[1,16], index: 4, kind: input, shape index: {}]
  %s5 = inlined_call_operand.vmem [shape: bf16[16,128], index: 5, kind: input, shape index: {}]
  %s6 = inlined_call_operand.vmem [shape: f32[1,128], index: 6, kind: input, shape index: {}]
  %s7 = inlined_call_operand.hbm [shape: f32[8,128], index: 7, kind: output, shape index: {}]
  %s8 = sld [smem:[#allocation0]]
  $region38: #{tpu_custom_call.1} parent=0
    _
  %s10 = ssub.s32 1, %s8
  %s11 = scalar_select 0, %s10, %s8
  $region1: #{tpu_custom_call.1} parent=0
    #allocation2 [shape = 'u8[4096]{0}', space=vmem, size = 0x1000, scoped, tag = 'output window, operand 0, single buffered']
    #allocation3 [shape = 's32[1]{0}', space=sflag, size = 0x4, scoped, tag = 'scoped memory for tpu_custom_call.1']
    %12 = vsyncpa [#allocation3], 0
    // Predicated region
    $region2: #{tpu_custom_call.1} parent=1 // pred_check
      _
    $region3: #{tpu_custom_call.1} parent=1 // pred_check_branch
      %14 = sbr.rel (0) target = $region5
    $region4: #{tpu_custom_call.1} parent=1 // pred_region
      _
    $region5: #{tpu_custom_call.1} parent=1 // pred_fallthru
      _
    // Predicated region
    $region6: #{tpu_custom_call.1} parent=1 // pred_check
      _
    $region7: #{tpu_custom_call.1} parent=1 // pred_check_branch
      %16 = sbr.rel (0) target = $region9
    $region8: #{tpu_custom_call.1} parent=1 // pred_region
      _
    $region9: #{tpu_custom_call.1} parent=1 // pred_fallthru
      _
    // Predicated region
    $region10: #{tpu_custom_call.1} parent=1 // pred_check
      _
    $region11: #{tpu_custom_call.1} parent=1 // pred_check_branch
      %18 = sbr.rel (0) target = $region13
    $region12: #{tpu_custom_call.1} parent=1 // pred_region
      _
    $region13: #{tpu_custom_call.1} parent=1 // pred_fallthru
      _
    // Predicated region
    $region14: #{tpu_custom_call.1} parent=1 // pred_check
      _
    $region15: #{tpu_custom_call.1} parent=1 // pred_check_branch
      %20 = sbr.rel (0) target = $region17
    $region16: #{tpu_custom_call.1} parent=1 // pred_region
      _
    $region17: #{tpu_custom_call.1} parent=1 // pred_fallthru
      _
    // Predicated region
    $region18: #{tpu_custom_call.1} parent=1 // pred_check
      _
    $region19: #{tpu_custom_call.1} parent=1 // pred_check_branch
      %22 = sbr.rel (0) target = $region21
    $region20: #{tpu_custom_call.1} parent=1 // pred_region
      _
    $region21: #{tpu_custom_call.1} parent=1 // pred_fallthru
      _
    // Predicated region
    $region22: #{tpu_custom_call.1} parent=1 // pred_check
      _
    $region23: #{tpu_custom_call.1} parent=1 // pred_check_branch
      %24 = sbr.rel (0) target = $region25
    $region24: #{tpu_custom_call.1} parent=1 // pred_region
      _
    $region25: #{tpu_custom_call.1} parent=1 // pred_fallthru
      _
    // Predicated region
    $region26: #{tpu_custom_call.1} parent=1 // pred_check
      _
    $region27: #{tpu_custom_call.1} parent=1 // pred_check_branch
      %26 = sbr.rel (0) target = $region29
    $region28: #{tpu_custom_call.1} parent=1 // pred_region
      _
    $region29: #{tpu_custom_call.1} parent=1 // pred_fallthru
      _
    %v28 = vld [vmem:[%s0] sm:$0xf]
    %v29 = vld [vmem:[%s1] sm:$0xf]
    %v30 = vld [vmem:[%s1 + $0x4] sm:$0xf]
    %v31 = vld [vmem:[%s1 + $0x8] sm:$0xf]
    %v32 = vld [vmem:[%s1 + $0xc] sm:$0xf]
    %v33 = vld [vmem:[%s1 + $0x10] sm:$0xf]
    %v34 = vld [vmem:[%s1 + $0x14] sm:$0xf]
    %v35 = vld [vmem:[%s1 + $0x18] sm:$0xf]
    %v36 = vld [vmem:[%s1 + $0x1c] sm:$0xf]
    %v37 = vld [vmem:[%s2] sm:$0x1]
    %v39 = vperm.slane %v37, 0
    %v49 = vunpack.c.l.b16 %v29
    %v50 = vunpack.c.l.b16 %v30
    %v51 = vunpack.c.l.b16 %v31
    %v52 = vunpack.c.l.b16 %v32
    %v53 = vunpack.c.l.b16 %v33
    %v54 = vunpack.c.l.b16 %v34
    %v55 = vunpack.c.l.b16 %v35
    %v56 = vunpack.c.l.b16 %v36
    %v57 = vpack.c.b16 %v50, %v49
    %v58 = vpack.c.b16 %v52, %v51
    %v59 = vpack.c.b16 %v54, %v53
    %v60 = vpack.c.b16 %v56, %v55
    %vm65 = vcmask 523264
    %v67 = vsel %vm65, %v28, 0
    %69 = vmatpush.bf16.msra.mxu0 0
    %70 = vmatpush.bf16.msra.mxu0 0
    %71 = vmatpush.bf16.msra.mxu0 0
    %72 = vmatpush.bf16.msra.mxu0 0
    %73 = vmatpush.bf16.msra.mxu0 %v60
    %74 = vmatpush.bf16.msra.mxu0 %v59
    %75 = vmatpush.bf16.msra.mxu0 %v58
    %76 = vmatpush.bf16.msra.mxu0 %v57
    %77 = vmatmul.bf16.gmra.mxu0 %v67
    %v78 = vpop.f32.mrf.mxu0
    %v79 = vadd.f32 %v39, %v78
    %v80 = vpop.f32.mrf.mxu0
    %81 = vdwg.mxu0
    %v82 = vmax.f32 %v79, 0.0
    %v83 = vpack.c.bf16 %v82, %v82
    %v84 = vld [vmem:[%s3] sm:$0xf]
    %v85 = vld [vmem:[%s3 + $0x4] sm:$0xf]
    %v86 = vld [vmem:[%s3 + $0x8] sm:$0xf]
    %v87 = vld [vmem:[%s3 + $0xc] sm:$0xf]
    %v88 = vld [vmem:[%s4] sm:$0x1]
    %v90 = vperm.slane %v88, 0
    %v96 = vunpack.c.l.b16 %v84
    %v97 = vunpack.c.l.b16 %v85
    %v98 = vunpack.c.l.b16 %v86
    %v99 = vunpack.c.l.b16 %v87
    %v100 = vpack.c.b16 %v97, %v96
    %v101 = vpack.c.b16 %v99, %v98
    %vm104 = vcmask 261120
    %v106 = vsel %vm104, %v83, 0
    %108 = vmatpush.bf16.msra.mxu0 0
    %109 = vmatpush.bf16.msra.mxu0 0
    %110 = vmatpush.bf16.msra.mxu0 0
    %111 = vmatpush.bf16.msra.mxu0 0
    %112 = vmatpush.bf16.msra.mxu0 0
    %113 = vmatpush.bf16.msra.mxu0 0
    %114 = vmatpush.bf16.msra.mxu0 %v101
    %115 = vmatpush.bf16.msra.mxu0 %v100
    %116 = vmatmul.bf16.gmra.mxu0 %v106
    %v117 = vpop.f32.mrf.mxu0
    %v118 = vadd.f32 %v90, %v117
    %v119 = vpop.f32.mrf.mxu0
    %120 = vdwg.mxu0
    %v121 = vmax.f32 %v118, 0.0
    %v122 = vpack.c.bf16 %v121, %v121
    %v123 = vld [vmem:[%s5] sm:$0xf]
    %v124 = vld [vmem:[%s5 + $0x4] sm:$0xf]
    %v125 = vld [vmem:[%s6] sm:$0x1]
    %v127 = vperm.slane %v125, 0
    %v131 = vunpack.c.l.b16 %v123
    %v132 = vunpack.c.l.b16 %v124
    %v133 = vpack.c.b16 %v132, %v131
    %vm135 = vcmask 130048
    %v137 = vsel %vm135, %v122, 0
    %139 = vmatpush.bf16.msra.mxu0 0
    %140 = vmatpush.bf16.msra.mxu0 0
    %141 = vmatpush.bf16.msra.mxu0 0
    %142 = vmatpush.bf16.msra.mxu0 0
    %143 = vmatpush.bf16.msra.mxu0 0
    %144 = vmatpush.bf16.msra.mxu0 0
    %145 = vmatpush.bf16.msra.mxu0 0
    %146 = vmatpush.bf16.msra.mxu0 %v133
    %147 = vmatmul.bf16.gmra.mxu0 %v137
    %v148 = vpop.f32.mrf.mxu0
    %v149 = vadd.f32 %v127, %v148
    %v150 = vpop.f32.mrf.mxu0
    %151 = vdwg.mxu0
    %152 = vmax.xlane.f32.xlu0 %v149
    %v153 = vpop.xlane.xlu0 %152
    %v154 = vsub.f32 %v149, %v153
    %v155 = vmul.f32 %v154, 1.442695
    %v156 = vpow.pop %v155
    %157 = vadd.xlane.f32.xlu0 %v156
    %v158 = vpop.xlane.xlu0 %157
    %v159 = vlog2.pop %v158
    %v160 = vmul.f32 %v159, 0.6931472
    %v161 = vsub.f32 %v154, %v160
    %162 = vst [vmem:[#allocation2] sm:$0xff] %v161
    // Predicated region
    $region30: #{tpu_custom_call.1} parent=1 // pred_check
      _
    $region31: #{tpu_custom_call.1} parent=1 // pred_check_branch
      %164 = sbr.rel (0) target = $region33
    $region32: #{tpu_custom_call.1} parent=1 // pred_region
      %166 = vsyncadd [#allocation3], 0
      %s168 = sshll.u32 [#allocation2], 4
      %s169 = int_to_ptr.vmem [resolvable:$true] %s168
      %s170 = sshll.u32 %s7, 4
      %s171 = int_to_ptr.hbm [resolvable:$true] %s170
      %173 = dma.vmem_to_hbm [thread:$0]  %s169, 128, %s171, [#allocation3]
    $region33: #{tpu_custom_call.1} parent=1 // pred_fallthru
      _
    // Predicated region
    $region34: #{tpu_custom_call.1} parent=1 // pred_check
      _
    $region35: #{tpu_custom_call.1} parent=1 // pred_check_branch
      %175 = sbr.rel (0) target = $region37
    $region36: #{tpu_custom_call.1} parent=1 // pred_region
      %177 = dma.done [#allocation3], 128
    $region37: #{tpu_custom_call.1} parent=1 // pred_fallthru
      _
    %178 = vsyncpa [#allocation3], 1

</llo_original>
